<compile_context>
chip_gen: v5e
topology: v5e:2x2
jax: 0.10.0
libtpu: 0.0.40
codegen_flags: <defaults>
</compile_context>

<pallas_src>
import functools

import jax
import jax.numpy as jnp
from jax.experimental import pallas as pl
from jax.experimental.pallas import tpu as pltpu


def _embeddings_kernel(ids_ref,              # (B, S_pad) int32 token ids (SMEM, scalar prefetch)
                       w_hbm,                # (V_pad, H_pad) word-embedding table (HBM via pl.ANY)
                       pos_ref,              # (TB, H_pad) contiguous position rows for this tile
                       gamma_ref, beta_ref,  # (1, H_pad) LayerNorm weight / bias
                       out_ref,              # (1, TB, H_pad) output tile
                       wbuf,                 # (2, TB, H_pad) VMEM gather double buffer
                       sem,                  # (2,) DMA semaphores, one per slot
                       *, eps, tb, h_real, mask_h, unroll=8):
    s = pl.program_id(0)          # sequence-tile index (outer, "parallel")
    b = pl.program_id(1)          # batch index (inner, "arbitrary" -> sequential)
    nb = pl.num_programs(1)
    slot = b & 1
    base = pl.multiple_of(s * tb, tb)

    def issue_rows(batch_idx, slot_idx):
        # TB row DMAs HBM -> VMEM, partially unrolled so descriptor issue is not
        # throttled by per-iteration scalar overhead.
        @pl.loop(0, tb // unroll)
        def _(j):
            for u in range(unroll):
                i = j * unroll + u
                tok = ids_ref[batch_idx, base + i]
                pltpu.make_async_copy(
                    w_hbm.at[pl.ds(tok, 1)],
                    wbuf.at[slot_idx, pl.ds(i, 1)],
                    sem.at[slot_idx]).start()

    def wait_rows(slot_idx):
        # One wait whose byte count equals all TB issued single-row copies.
        pltpu.make_async_copy(
            w_hbm.at[pl.ds(0, tb)], wbuf.at[slot_idx], sem.at[slot_idx]).wait()

    # Prime the current slot on the first batch step of each sequence tile.
    @pl.when(b == 0)
    def _():
        issue_rows(0, slot)

    wait_rows(slot)

    # Prefetch the next batch element's rows into the other slot so its gather
    # overlaps this step's add + LayerNorm compute.  Never crosses a sequence
    # tile, so every issued DMA is waited on by the same core.
    @pl.when(b + 1 < nb)
    def _():
        issue_rows(b + 1, 1 - slot)

    # ---- Add + LayerNorm (f32 math); mask only when H is padded. ----
    x = wbuf[slot].astype(jnp.float32) + pos_ref[...].astype(jnp.float32)   # (TB, H_pad)
    inv_h = 1.0 / float(h_real)
    if mask_h:
        lane = jax.lax.broadcasted_iota(jnp.int32, x.shape, 1)
        valid = lane < h_real
        mean = jnp.sum(jnp.where(valid, x, 0.0), axis=-1, keepdims=True) * inv_h
        diff = jnp.where(valid, x - mean, 0.0)
    else:
        mean = jnp.sum(x, axis=-1, keepdims=True) * inv_h
        diff = x - mean
    var = jnp.sum(diff * diff, axis=-1, keepdims=True) * inv_h
    normed = diff * jax.lax.rsqrt(var + eps)
    y = (normed * gamma_ref[...].astype(jnp.float32)
         + beta_ref[...].astype(jnp.float32))
    # TODO(synk): nn.Dropout is identity in eval mode; training-mode dropout
    # (pltpu.prng_seed + stateful_bernoulli) intentionally not applied here.
    out_ref[0] = y.astype(out_ref.dtype)


def transformer_embeddings(input_ids, word_emb, pos_emb, gamma, beta,
                           *, eps=1e-12, out_dtype=None):
    """Pallas equivalent of TransformerEmbeddings.forward (eval mode).

    Tables may be f32 or bf16; `out_dtype` defaults to the word-table dtype.
    All add/LayerNorm math runs in f32 inside the kernel.
    """
    B, S = input_ids.shape
    V, H = word_emb.shape
    P, _ = pos_emb.shape
    assert S <= P, "sequence longer than max_position_embeddings"
    out_dtype = word_emb.dtype if out_dtype is None else out_dtype

    H_pad = -(-H // 128) * 128            # lane-dense last dim

    # Sequence tile: sublane multiple, large to amortize per-step overhead,
    # auto-shrunk so double-buffered gather + pipeline buffers fit a 16 MiB
    # VMEM budget (safe under the scoped default on v5e/v6e/v7x).
    if S >= 512:
        TB = 512
    elif S >= 256:
        TB = 256
    else:
        TB = max(8, -(-S // 8) * 8)
    bytes_per_row = H_pad * 2 * (jnp.dtype(word_emb.dtype).itemsize
                                 + jnp.dtype(pos_emb.dtype).itemsize
                                 + jnp.dtype(out_dtype).itemsize)
    while TB > 8 and TB * bytes_per_row > 16 * 1024 * 1024:
        TB = max(8, (TB // 2 // 8) * 8)

    S_pad = -(-S // TB) * TB
    n_s = S_pad // TB

    ids = input_ids.astype(jnp.int32)
    if S_pad != S:
        ids = jnp.pad(ids, ((0, 0), (0, S_pad - S)))   # pad token id 0 (valid row)

    # Position rows 0..S_pad-1, contiguous (zero-padded if needed).
    pe = pos_emb[:min(P, S_pad)]
    if pe.shape[0] < S_pad:
        pe = jnp.pad(pe, ((0, S_pad - pe.shape[0]), (0, 0)))

    we = word_emb
    g2 = gamma.reshape(1, H)
    b2 = beta.reshape(1, H)
    if H_pad != H:
        we = jnp.pad(we, ((0, 0), (0, H_pad - H)))
        pe = jnp.pad(pe, ((0, 0), (0, H_pad - H)))
        g2 = jnp.pad(g2, ((0, 0), (0, H_pad - H)))
        b2 = jnp.pad(b2, ((0, 0), (0, H_pad - H)))
    # Pad vocab rows to a sublane multiple and to >= TB so the single-wait
    # descriptor's source slice stays in bounds.
    V_pad = max(-(-V // 8) * 8, TB)
    if V_pad != V:
        we = jnp.pad(we, ((0, V_pad - V), (0, 0)))

    kernel = functools.partial(_embeddings_kernel, eps=float(eps), tb=TB,
                               h_real=H, mask_h=(H_pad != H))

    out = pl.pallas_call(
        kernel,
        out_shape=jax.ShapeDtypeStruct((B, S_pad, H_pad), out_dtype),
        grid_spec=pltpu.PrefetchScalarGridSpec(
            num_scalar_prefetch=1,                      # token ids -> SMEM
            grid=(n_s, B),                              # seq-tile outer, batch inner
            in_specs=[
                pl.BlockSpec(memory_space=pl.ANY),                      # word table (HBM)
                pl.BlockSpec((TB, H_pad), lambda s, b, ids: (s, 0)),    # pos rows (reused across b)
                pl.BlockSpec((1, H_pad), lambda s, b, ids: (0, 0)),     # gamma
                pl.BlockSpec((1, H_pad), lambda s, b, ids: (0, 0)),     # beta
            ],
            out_specs=pl.BlockSpec((1, TB, H_pad), lambda s, b, ids: (b, s, 0)),
            scratch_shapes=[
                pltpu.VMEM((2, TB, H_pad), word_emb.dtype),   # gather double buffer
                pltpu.SemaphoreType.DMA((2,)),                # one sem per slot
            ],
        ),
        compiler_params=pltpu.CompilerParams(
            dimension_semantics=("parallel", "arbitrary")),
    )(ids, we, pe, g2, b2)

    return out[:, :S, :H]


def _reference(input_ids, word_emb, pos_emb, gamma, beta, eps=1e-12):
    """Pure-JAX reference mirroring the PyTorch forward (eval mode)."""
    B, S = input_ids.shape
    we = jnp.take(word_emb, input_ids, axis=0)                  # (B, S, H)
    pe = jnp.take(pos_emb, jnp.arange(S), axis=0)[None, :, :]   # (1, S, H)
    x = we + pe
    mean = jnp.mean(x, axis=-1, keepdims=True)
    var = jnp.mean(jnp.square(x - mean), axis=-1, keepdims=True)
    return (x - mean) * jax.lax.rsqrt(var + eps) * gamma + beta


if __name__ == "__main__":
    # Small synthetic "config"
    vocab_size = 96
    hidden_size = 32
    max_position_embeddings = 64
    pad_token_id = 0
    layer_norm_eps = 1e-12
    B, S = 2, 8

    key = jax.random.PRNGKey(0)
    k_w, k_p, k_ids = jax.random.split(key, 3)

    # nn.Embedding ~ N(0,1), padding_idx row zeroed; LayerNorm: weight=1, bias=0.
    word_emb = jax.random.normal(k_w, (vocab_size, hidden_size), jnp.float32)
    word_emb = word_emb.at[pad_token_id].set(0.0)
    pos_emb = jax.random.normal(k_p, (max_position_embeddings, hidden_size), jnp.float32)
    gamma = jnp.ones((hidden_size,), jnp.float32)
    beta = jnp.zeros((hidden_size,), jnp.float32)

    input_ids = jax.random.randint(k_ids, (B, S), 0, vocab_size, dtype=jnp.int32)

    out = transformer_embeddings(input_ids, word_emb, pos_emb, gamma, beta,
                                 eps=layer_norm_eps)
    out = jax.block_until_ready(out)

    ref = _reference(input_ids, word_emb, pos_emb, gamma, beta, eps=layer_norm_eps)
    assert out.shape == (B, S, hidden_size)
    assert jnp.allclose(out, ref, atol=1e-5, rtol=1e-5), "mismatch vs reference"

    print("KERNEL_OK")
</pallas_src>

<mosaic_0001>
module attributes {stable_mosaic.version = 11 : i64} {
  func.func @_embeddings_kernel(%arg0: i32, %arg1: i32, %arg2: memref<2x8xi32, #tpu.memory_space<smem>>, %arg3: memref<96x128xf32, #tpu.memory_space<any>>, %arg4: memref<8x128xf32, #tpu.memory_space<vmem>>, %arg5: memref<1x128xf32, #tpu.memory_space<vmem>>, %arg6: memref<1x128xf32, #tpu.memory_space<vmem>>, %arg7: memref<1x8x128xf32, #tpu.memory_space<vmem>>, %arg8: memref<2x8x128xf32, #tpu.memory_space<vmem>>, %arg9: memref<2x!tpu.dma_semaphore, #tpu.memory_space<semaphore_mem>>) attributes {dimension_semantics = [#tpu.dimension_semantics<parallel>, #tpu.dimension_semantics<arbitrary>], iteration_bounds = array<i64: 1, 2>, scalar_prefetch = 1 : i64, scratch_operands = 2 : i64, tpu.core_type = #tpu.core_type<tc>, window_params = [{}, {transform_indices = @transform_1, window_bounds = array<i64: 8, 128>}, {pipeline_mode = #tpu.pipeline_mode<synchronous>, transform_indices = @transform_2, window_bounds = array<i64: 1, 128>}, {pipeline_mode = #tpu.pipeline_mode<synchronous>, transform_indices = @transform_3, window_bounds = array<i64: 1, 128>}, {transform_indices = @transform_4, window_bounds = array<i64: 1, 8, 128>}]} {
    %c1_i32 = arith.constant 1 : i32
    %0 = arith.andi %arg1, %c1_i32 : i32
    %c8_i32 = arith.constant 8 : i32
    %1 = arith.muli %arg0, %c8_i32 : i32
    %2 = tpu.assume_multiple %1, 8 : i32
    %c0_i32 = arith.constant 0 : i32
    %3 = arith.cmpi eq, %arg1, %c0_i32 : i32
    %4 = arith.extui %3 : i1 to i32
    %c0_i32_0 = arith.constant 0 : i32
    %5 = arith.cmpi ne, %4, %c0_i32_0 : i32
    scf.if %5 {
      %c0_i32_23 = arith.constant 0 : i32
      %c1_i32_24 = arith.constant 1 : i32
      %52 = arith.muli %c0_i32_23, %c1_i32_24 : i32
      %c0_i32_25 = arith.constant 0 : i32
      %53 = arith.addi %c0_i32_25, %52 : i32
      %c8_i32_26 = arith.constant 8 : i32
      %54 = arith.muli %53, %c8_i32_26 : i32
      %c0_i32_27 = arith.constant 0 : i32
      %55 = arith.addi %54, %c0_i32_27 : i32
      %56 = arith.addi %2, %55 : i32
      %c0_28 = arith.constant 0 : index
      %57 = arith.index_cast %56 : i32 to index
      %58 = memref.load %arg2[%c0_28, %57] : memref<2x8xi32, #tpu.memory_space<smem>>
      %c0_i32_29 = arith.constant 0 : i32
      %59 = tpu.memref_slice %arg3[%58, %c0_i32_29] : memref<96x128xf32, #tpu.memory_space<any>> -> memref<1x128xf32, #tpu.memory_space<any>>
      %c0_i32_30 = arith.constant 0 : i32
      %60 = tpu.memref_slice %arg8[%0, %55, %c0_i32_30] : memref<2x8x128xf32, #tpu.memory_space<vmem>> -> memref<1x1x128xf32, #tpu.memory_space<vmem>>
      %61 = tpu.memref_squeeze %60 : memref<1x1x128xf32, #tpu.memory_space<vmem>> -> memref<1x128xf32, #tpu.memory_space<vmem>>
      %62 = tpu.memref_slice %arg9[%0] : memref<2x!tpu.dma_semaphore, #tpu.memory_space<semaphore_mem>> -> memref<1x!tpu.dma_semaphore, #tpu.memory_space<semaphore_mem>>
      %63 = tpu.memref_squeeze %62 : memref<1x!tpu.dma_semaphore, #tpu.memory_space<semaphore_mem>> -> memref<!tpu.dma_semaphore, #tpu.memory_space<semaphore_mem>>
      tpu.enqueue_dma source(%59 : memref<1x128xf32, #tpu.memory_space<any>>) target(%61 : memref<1x128xf32, #tpu.memory_space<vmem>>) target_semaphore(%63 : memref<!tpu.dma_semaphore, #tpu.memory_space<semaphore_mem>>)
      %c8_i32_31 = arith.constant 8 : i32
      %64 = arith.muli %53, %c8_i32_31 : i32
      %c1_i32_32 = arith.constant 1 : i32
      %65 = arith.addi %64, %c1_i32_32 : i32
      %66 = arith.addi %2, %65 : i32
      %c0_33 = arith.constant 0 : index
      %67 = arith.index_cast %66 : i32 to index
      %68 = memref.load %arg2[%c0_33, %67] : memref<2x8xi32, #tpu.memory_space<smem>>
      %c0_i32_34 = arith.constant 0 : i32
      %69 = tpu.memref_slice %arg3[%68, %c0_i32_34] : memref<96x128xf32, #tpu.memory_space<any>> -> memref<1x128xf32, #tpu.memory_space<any>>
      %c0_i32_35 = arith.constant 0 : i32
      %70 = tpu.memref_slice %arg8[%0, %65, %c0_i32_35] : memref<2x8x128xf32, #tpu.memory_space<vmem>> -> memref<1x1x128xf32, #tpu.memory_space<vmem>>
      %71 = tpu.memref_squeeze %70 : memref<1x1x128xf32, #tpu.memory_space<vmem>> -> memref<1x128xf32, #tpu.memory_space<vmem>>
      %72 = tpu.memref_slice %arg9[%0] : memref<2x!tpu.dma_semaphore, #tpu.memory_space<semaphore_mem>> -> memref<1x!tpu.dma_semaphore, #tpu.memory_space<semaphore_mem>>
      %73 = tpu.memref_squeeze %72 : memref<1x!tpu.dma_semaphore, #tpu.memory_space<semaphore_mem>> -> memref<!tpu.dma_semaphore, #tpu.memory_space<semaphore_mem>>
      tpu.enqueue_dma source(%69 : memref<1x128xf32, #tpu.memory_space<any>>) target(%71 : memref<1x128xf32, #tpu.memory_space<vmem>>) target_semaphore(%73 : memref<!tpu.dma_semaphore, #tpu.memory_space<semaphore_mem>>)
      %c8_i32_36 = arith.constant 8 : i32
      %74 = arith.muli %53, %c8_i32_36 : i32
      %c2_i32_37 = arith.constant 2 : i32
      %75 = arith.addi %74, %c2_i32_37 : i32
      %76 = arith.addi %2, %75 : i32
      %c0_38 = arith.constant 0 : index
      %77 = arith.index_cast %76 : i32 to index
      %78 = memref.load %arg2[%c0_38, %77] : memref<2x8xi32, #tpu.memory_space<smem>>
      %c0_i32_39 = arith.constant 0 : i32
      %79 = tpu.memref_slice %arg3[%78, %c0_i32_39] : memref<96x128xf32, #tpu.memory_space<any>> -> memref<1x128xf32, #tpu.memory_space<any>>
      %c0_i32_40 = arith.constant 0 : i32
      %80 = tpu.memref_slice %arg8[%0, %75, %c0_i32_40] : memref<2x8x128xf32, #tpu.memory_space<vmem>> -> memref<1x1x128xf32, #tpu.memory_space<vmem>>
      %81 = tpu.memref_squeeze %80 : memref<1x1x128xf32, #tpu.memory_space<vmem>> -> memref<1x128xf32, #tpu.memory_space<vmem>>
      %82 = tpu.memref_slice %arg9[%0] : memref<2x!tpu.dma_semaphore, #tpu.memory_space<semaphore_mem>> -> memref<1x!tpu.dma_semaphore, #tpu.memory_space<semaphore_mem>>
      %83 = tpu.memref_squeeze %82 : memref<1x!tpu.dma_semaphore, #tpu.memory_space<semaphore_mem>> -> memref<!tpu.dma_semaphore, #tpu.memory_space<semaphore_mem>>
      tpu.enqueue_dma source(%79 : memref<1x128xf32, #tpu.memory_space<any>>) target(%81 : memref<1x128xf32, #tpu.memory_space<vmem>>) target_semaphore(%83 : memref<!tpu.dma_semaphore, #tpu.memory_space<semaphore_mem>>)
      %c8_i32_41 = arith.constant 8 : i32
      %84 = arith.muli %53, %c8_i32_41 : i32
      %c3_i32 = arith.constant 3 : i32
      %85 = arith.addi %84, %c3_i32 : i32
      %86 = arith.addi %2, %85 : i32
      %c0_42 = arith.constant 0 : index
      %87 = arith.index_cast %86 : i32 to index
      %88 = memref.load %arg2[%c0_42, %87] : memref<2x8xi32, #tpu.memory_space<smem>>
      %c0_i32_43 = arith.constant 0 : i32
      %89 = tpu.memref_slice %arg3[%88, %c0_i32_43] : memref<96x128xf32, #tpu.memory_space<any>> -> memref<1x128xf32, #tpu.memory_space<any>>
      %c0_i32_44 = arith.constant 0 : i32
      %90 = tpu.memref_slice %arg8[%0, %85, %c0_i32_44] : memref<2x8x128xf32, #tpu.memory_space<vmem>> -> memref<1x1x128xf32, #tpu.memory_space<vmem>>
      %91 = tpu.memref_squeeze %90 : memref<1x1x128xf32, #tpu.memory_space<vmem>> -> memref<1x128xf32, #tpu.memory_space<vmem>>
      %92 = tpu.memref_slice %arg9[%0] : memref<2x!tpu.dma_semaphore, #tpu.memory_space<semaphore_mem>> -> memref<1x!tpu.dma_semaphore, #tpu.memory_space<semaphore_mem>>
      %93 = tpu.memref_squeeze %92 : memref<1x!tpu.dma_semaphore, #tpu.memory_space<semaphore_mem>> -> memref<!tpu.dma_semaphore, #tpu.memory_space<semaphore_mem>>
      tpu.enqueue_dma source(%89 : memref<1x128xf32, #tpu.memory_space<any>>) target(%91 : memref<1x128xf32, #tpu.memory_space<vmem>>) target_semaphore(%93 : memref<!tpu.dma_semaphore, #tpu.memory_space<semaphore_mem>>)
      %c8_i32_45 = arith.constant 8 : i32
      %94 = arith.muli %53, %c8_i32_45 : i32
      %c4_i32 = arith.constant 4 : i32
      %95 = arith.addi %94, %c4_i32 : i32
      %96 = arith.addi %2, %95 : i32
      %c0_46 = arith.constant 0 : index
      %97 = arith.index_cast %96 : i32 to index
      %98 = memref.load %arg2[%c0_46, %97] : memref<2x8xi32, #tpu.memory_space<smem>>
      %c0_i32_47 = arith.constant 0 : i32
      %99 = tpu.memref_slice %arg3[%98, %c0_i32_47] : memref<96x128xf32, #tpu.memory_space<any>> -> memref<1x128xf32, #tpu.memory_space<any>>
      %c0_i32_48 = arith.constant 0 : i32
      %100 = tpu.memref_slice %arg8[%0, %95, %c0_i32_48] : memref<2x8x128xf32, #tpu.memory_space<vmem>> -> memref<1x1x128xf32, #tpu.memory_space<vmem>>
      %101 = tpu.memref_squeeze %100 : memref<1x1x128xf32, #tpu.memory_space<vmem>> -> memref<1x128xf32, #tpu.memory_space<vmem>>
      %102 = tpu.memref_slice %arg9[%0] : memref<2x!tpu.dma_semaphore, #tpu.memory_space<semaphore_mem>> -> memref<1x!tpu.dma_semaphore, #tpu.memory_space<semaphore_mem>>
      %103 = tpu.memref_squeeze %102 : memref<1x!tpu.dma_semaphore, #tpu.memory_space<semaphore_mem>> -> memref<!tpu.dma_semaphore, #tpu.memory_space<semaphore_mem>>
      tpu.enqueue_dma source(%99 : memref<1x128xf32, #tpu.memory_space<any>>) target(%101 : memref<1x128xf32, #tpu.memory_space<vmem>>) target_semaphore(%103 : memref<!tpu.dma_semaphore, #tpu.memory_space<semaphore_mem>>)
      %c8_i32_49 = arith.constant 8 : i32
      %104 = arith.muli %53, %c8_i32_49 : i32
      %c5_i32 = arith.constant 5 : i32
      %105 = arith.addi %104, %c5_i32 : i32
      %106 = arith.addi %2, %105 : i32
      %c0_50 = arith.constant 0 : index
      %107 = arith.index_cast %106 : i32 to index
      %108 = memref.load %arg2[%c0_50, %107] : memref<2x8xi32, #tpu.memory_space<smem>>
      %c0_i32_51 = arith.constant 0 : i32
      %109 = tpu.memref_slice %arg3[%108, %c0_i32_51] : memref<96x128xf32, #tpu.memory_space<any>> -> memref<1x128xf32, #tpu.memory_space<any>>
      %c0_i32_52 = arith.constant 0 : i32
      %110 = tpu.memref_slice %arg8[%0, %105, %c0_i32_52] : memref<2x8x128xf32, #tpu.memory_space<vmem>> -> memref<1x1x128xf32, #tpu.memory_space<vmem>>
      %111 = tpu.memref_squeeze %110 : memref<1x1x128xf32, #tpu.memory_space<vmem>> -> memref<1x128xf32, #tpu.memory_space<vmem>>
      %112 = tpu.memref_slice %arg9[%0] : memref<2x!tpu.dma_semaphore, #tpu.memory_space<semaphore_mem>> -> memref<1x!tpu.dma_semaphore, #tpu.memory_space<semaphore_mem>>
      %113 = tpu.memref_squeeze %112 : memref<1x!tpu.dma_semaphore, #tpu.memory_space<semaphore_mem>> -> memref<!tpu.dma_semaphore, #tpu.memory_space<semaphore_mem>>
      tpu.enqueue_dma source(%109 : memref<1x128xf32, #tpu.memory_space<any>>) target(%111 : memref<1x128xf32, #tpu.memory_space<vmem>>) target_semaphore(%113 : memref<!tpu.dma_semaphore, #tpu.memory_space<semaphore_mem>>)
      %c8_i32_53 = arith.constant 8 : i32
      %114 = arith.muli %53, %c8_i32_53 : i32
      %c6_i32 = arith.constant 6 : i32
      %115 = arith.addi %114, %c6_i32 : i32
      %116 = arith.addi %2, %115 : i32
      %c0_54 = arith.constant 0 : index
      %117 = arith.index_cast %116 : i32 to index
      %118 = memref.load %arg2[%c0_54, %117] : memref<2x8xi32, #tpu.memory_space<smem>>
      %c0_i32_55 = arith.constant 0 : i32
      %119 = tpu.memref_slice %arg3[%118, %c0_i32_55] : memref<96x128xf32, #tpu.memory_space<any>> -> memref<1x128xf32, #tpu.memory_space<any>>
      %c0_i32_56 = arith.constant 0 : i32
      %120 = tpu.memref_slice %arg8[%0, %115, %c0_i32_56] : memref<2x8x128xf32, #tpu.memory_space<vmem>> -> memref<1x1x128xf32, #tpu.memory_space<vmem>>
      %121 = tpu.memref_squeeze %120 : memref<1x1x128xf32, #tpu.memory_space<vmem>> -> memref<1x128xf32, #tpu.memory_space<vmem>>
      %122 = tpu.memref_slice %arg9[%0] : memref<2x!tpu.dma_semaphore, #tpu.memory_space<semaphore_mem>> -> memref<1x!tpu.dma_semaphore, #tpu.memory_space<semaphore_mem>>
      %123 = tpu.memref_squeeze %122 : memref<1x!tpu.dma_semaphore, #tpu.memory_space<semaphore_mem>> -> memref<!tpu.dma_semaphore, #tpu.memory_space<semaphore_mem>>
      tpu.enqueue_dma source(%119 : memref<1x128xf32, #tpu.memory_space<any>>) target(%121 : memref<1x128xf32, #tpu.memory_space<vmem>>) target_semaphore(%123 : memref<!tpu.dma_semaphore, #tpu.memory_space<semaphore_mem>>)
      %c8_i32_57 = arith.constant 8 : i32
      %124 = arith.muli %53, %c8_i32_57 : i32
      %c7_i32 = arith.constant 7 : i32
      %125 = arith.addi %124, %c7_i32 : i32
      %126 = arith.addi %2, %125 : i32
      %c0_58 = arith.constant 0 : index
      %127 = arith.index_cast %126 : i32 to index
      %128 = memref.load %arg2[%c0_58, %127] : memref<2x8xi32, #tpu.memory_space<smem>>
      %c0_i32_59 = arith.constant 0 : i32
      %129 = tpu.memref_slice %arg3[%128, %c0_i32_59] : memref<96x128xf32, #tpu.memory_space<any>> -> memref<1x128xf32, #tpu.memory_space<any>>
      %c0_i32_60 = arith.constant 0 : i32
      %130 = tpu.memref_slice %arg8[%0, %125, %c0_i32_60] : memref<2x8x128xf32, #tpu.memory_space<vmem>> -> memref<1x1x128xf32, #tpu.memory_space<vmem>>
      %131 = tpu.memref_squeeze %130 : memref<1x1x128xf32, #tpu.memory_space<vmem>> -> memref<1x128xf32, #tpu.memory_space<vmem>>
      %132 = tpu.memref_slice %arg9[%0] : memref<2x!tpu.dma_semaphore, #tpu.memory_space<semaphore_mem>> -> memref<1x!tpu.dma_semaphore, #tpu.memory_space<semaphore_mem>>
      %133 = tpu.memref_squeeze %132 : memref<1x!tpu.dma_semaphore, #tpu.memory_space<semaphore_mem>> -> memref<!tpu.dma_semaphore, #tpu.memory_space<semaphore_mem>>
      tpu.enqueue_dma source(%129 : memref<1x128xf32, #tpu.memory_space<any>>) target(%131 : memref<1x128xf32, #tpu.memory_space<vmem>>) target_semaphore(%133 : memref<!tpu.dma_semaphore, #tpu.memory_space<semaphore_mem>>)
      %c1_i32_61 = arith.constant 1 : i32
    } else {
    }
    %c0_i32_1 = arith.constant 0 : i32
    %c0_i32_2 = arith.constant 0 : i32
    %6 = tpu.memref_slice %arg3[%c0_i32_1, %c0_i32_2] : memref<96x128xf32, #tpu.memory_space<any>> -> memref<8x128xf32, #tpu.memory_space<any>>
    %c0_i32_3 = arith.constant 0 : i32
    %c0_i32_4 = arith.constant 0 : i32
    %7 = tpu.memref_slice %arg8[%0, %c0_i32_3, %c0_i32_4] : memref<2x8x128xf32, #tpu.memory_space<vmem>> -> memref<1x8x128xf32, #tpu.memory_space<vmem>>
    %8 = tpu.memref_squeeze %7 : memref<1x8x128xf32, #tpu.memory_space<vmem>> -> memref<8x128xf32, #tpu.memory_space<vmem>>
    %9 = tpu.memref_slice %arg9[%0] : memref<2x!tpu.dma_semaphore, #tpu.memory_space<semaphore_mem>> -> memref<1x!tpu.dma_semaphore, #tpu.memory_space<semaphore_mem>>
    %10 = tpu.memref_squeeze %9 : memref<1x!tpu.dma_semaphore, #tpu.memory_space<semaphore_mem>> -> memref<!tpu.dma_semaphore, #tpu.memory_space<semaphore_mem>>
    tpu.wait_dma2 semaphore(%10 : memref<!tpu.dma_semaphore, #tpu.memory_space<semaphore_mem>>) src(%6 : memref<8x128xf32, #tpu.memory_space<any>>) dst(%8 : memref<8x128xf32, #tpu.memory_space<vmem>>)
    %c1_i32_5 = arith.constant 1 : i32
    %11 = arith.addi %arg1, %c1_i32_5 : i32
    %c2_i32 = arith.constant 2 : i32
    %12 = arith.cmpi slt, %11, %c2_i32 : i32
    %13 = arith.extui %12 : i1 to i32
    %c0_i32_6 = arith.constant 0 : i32
    %14 = arith.cmpi ne, %13, %c0_i32_6 : i32
    scf.if %14 {
      %c1_i32_23 = arith.constant 1 : i32
      %52 = arith.addi %arg1, %c1_i32_23 : i32
      %c1_i32_24 = arith.constant 1 : i32
      %53 = arith.subi %c1_i32_24, %0 : i32
      %c0_i32_25 = arith.constant 0 : i32
      %c1_i32_26 = arith.constant 1 : i32
      %54 = arith.muli %c0_i32_25, %c1_i32_26 : i32
      %c0_i32_27 = arith.constant 0 : i32
      %55 = arith.addi %c0_i32_27, %54 : i32
      %c8_i32_28 = arith.constant 8 : i32
      %56 = arith.muli %55, %c8_i32_28 : i32
      %c0_i32_29 = arith.constant 0 : i32
      %57 = arith.addi %56, %c0_i32_29 : i32
      %58 = arith.addi %2, %57 : i32
      %59 = arith.index_cast %52 : i32 to index
      %60 = arith.index_cast %58 : i32 to index
      %61 = memref.load %arg2[%59, %60] : memref<2x8xi32, #tpu.memory_space<smem>>
      %c0_i32_30 = arith.constant 0 : i32
      %62 = tpu.memref_slice %arg3[%61, %c0_i32_30] : memref<96x128xf32, #tpu.memory_space<any>> -> memref<1x128xf32, #tpu.memory_space<any>>
      %c0_i32_31 = arith.constant 0 : i32
      %63 = tpu.memref_slice %arg8[%53, %57, %c0_i32_31] : memref<2x8x128xf32, #tpu.memory_space<vmem>> -> memref<1x1x128xf32, #tpu.memory_space<vmem>>
      %64 = tpu.memref_squeeze %63 : memref<1x1x128xf32, #tpu.memory_space<vmem>> -> memref<1x128xf32, #tpu.memory_space<vmem>>
      %65 = tpu.memref_slice %arg9[%53] : memref<2x!tpu.dma_semaphore, #tpu.memory_space<semaphore_mem>> -> memref<1x!tpu.dma_semaphore, #tpu.memory_space<semaphore_mem>>
      %66 = tpu.memref_squeeze %65 : memref<1x!tpu.dma_semaphore, #tpu.memory_space<semaphore_mem>> -> memref<!tpu.dma_semaphore, #tpu.memory_space<semaphore_mem>>
      tpu.enqueue_dma source(%62 : memref<1x128xf32, #tpu.memory_space<any>>) target(%64 : memref<1x128xf32, #tpu.memory_space<vmem>>) target_semaphore(%66 : memref<!tpu.dma_semaphore, #tpu.memory_space<semaphore_mem>>)
      %c8_i32_32 = arith.constant 8 : i32
      %67 = arith.muli %55, %c8_i32_32 : i32
      %c1_i32_33 = arith.constant 1 : i32
      %68 = arith.addi %67, %c1_i32_33 : i32
      %69 = arith.addi %2, %68 : i32
      %70 = arith.index_cast %52 : i32 to index
      %71 = arith.index_cast %69 : i32 to index
      %72 = memref.load %arg2[%70, %71] : memref<2x8xi32, #tpu.memory_space<smem>>
      %c0_i32_34 = arith.constant 0 : i32
      %73 = tpu.memref_slice %arg3[%72, %c0_i32_34] : memref<96x128xf32, #tpu.memory_space<any>> -> memref<1x128xf32, #tpu.memory_space<any>>
      %c0_i32_35 = arith.constant 0 : i32
      %74 = tpu.memref_slice %arg8[%53, %68, %c0_i32_35] : memref<2x8x128xf32, #tpu.memory_space<vmem>> -> memref<1x1x128xf32, #tpu.memory_space<vmem>>
      %75 = tpu.memref_squeeze %74 : memref<1x1x128xf32, #tpu.memory_space<vmem>> -> memref<1x128xf32, #tpu.memory_space<vmem>>
      %76 = tpu.memref_slice %arg9[%53] : memref<2x!tpu.dma_semaphore, #tpu.memory_space<semaphore_mem>> -> memref<1x!tpu.dma_semaphore, #tpu.memory_space<semaphore_mem>>
      %77 = tpu.memref_squeeze %76 : memref<1x!tpu.dma_semaphore, #tpu.memory_space<semaphore_mem>> -> memref<!tpu.dma_semaphore, #tpu.memory_space<semaphore_mem>>
      tpu.enqueue_dma source(%73 : memref<1x128xf32, #tpu.memory_space<any>>) target(%75 : memref<1x128xf32, #tpu.memory_space<vmem>>) target_semaphore(%77 : memref<!tpu.dma_semaphore, #tpu.memory_space<semaphore_mem>>)
      %c8_i32_36 = arith.constant 8 : i32
      %78 = arith.muli %55, %c8_i32_36 : i32
      %c2_i32_37 = arith.constant 2 : i32
      %79 = arith.addi %78, %c2_i32_37 : i32
      %80 = arith.addi %2, %79 : i32
      %81 = arith.index_cast %52 : i32 to index
      %82 = arith.index_cast %80 : i32 to index
      %83 = memref.load %arg2[%81, %82] : memref<2x8xi32, #tpu.memory_space<smem>>
      %c0_i32_38 = arith.constant 0 : i32
      %84 = tpu.memref_slice %arg3[%83, %c0_i32_38] : memref<96x128xf32, #tpu.memory_space<any>> -> memref<1x128xf32, #tpu.memory_space<any>>
      %c0_i32_39 = arith.constant 0 : i32
      %85 = tpu.memref_slice %arg8[%53, %79, %c0_i32_39] : memref<2x8x128xf32, #tpu.memory_space<vmem>> -> memref<1x1x128xf32, #tpu.memory_space<vmem>>
      %86 = tpu.memref_squeeze %85 : memref<1x1x128xf32, #tpu.memory_space<vmem>> -> memref<1x128xf32, #tpu.memory_space<vmem>>
      %87 = tpu.memref_slice %arg9[%53] : memref<2x!tpu.dma_semaphore, #tpu.memory_space<semaphore_mem>> -> memref<1x!tpu.dma_semaphore, #tpu.memory_space<semaphore_mem>>
      %88 = tpu.memref_squeeze %87 : memref<1x!tpu.dma_semaphore, #tpu.memory_space<semaphore_mem>> -> memref<!tpu.dma_semaphore, #tpu.memory_space<semaphore_mem>>
      tpu.enqueue_dma source(%84 : memref<1x128xf32, #tpu.memory_space<any>>) target(%86 : memref<1x128xf32, #tpu.memory_space<vmem>>) target_semaphore(%88 : memref<!tpu.dma_semaphore, #tpu.memory_space<semaphore_mem>>)
      %c8_i32_40 = arith.constant 8 : i32
      %89 = arith.muli %55, %c8_i32_40 : i32
      %c3_i32 = arith.constant 3 : i32
      %90 = arith.addi %89, %c3_i32 : i32
      %91 = arith.addi %2, %90 : i32
      %92 = arith.index_cast %52 : i32 to index
      %93 = arith.index_cast %91 : i32 to index
      %94 = memref.load %arg2[%92, %93] : memref<2x8xi32, #tpu.memory_space<smem>>
      %c0_i32_41 = arith.constant 0 : i32
      %95 = tpu.memref_slice %arg3[%94, %c0_i32_41] : memref<96x128xf32, #tpu.memory_space<any>> -> memref<1x128xf32, #tpu.memory_space<any>>
      %c0_i32_42 = arith.constant 0 : i32
      %96 = tpu.memref_slice %arg8[%53, %90, %c0_i32_42] : memref<2x8x128xf32, #tpu.memory_space<vmem>> -> memref<1x1x128xf32, #tpu.memory_space<vmem>>
      %97 = tpu.memref_squeeze %96 : memref<1x1x128xf32, #tpu.memory_space<vmem>> -> memref<1x128xf32, #tpu.memory_space<vmem>>
      %98 = tpu.memref_slice %arg9[%53] : memref<2x!tpu.dma_semaphore, #tpu.memory_space<semaphore_mem>> -> memref<1x!tpu.dma_semaphore, #tpu.memory_space<semaphore_mem>>
      %99 = tpu.memref_squeeze %98 : memref<1x!tpu.dma_semaphore, #tpu.memory_space<semaphore_mem>> -> memref<!tpu.dma_semaphore, #tpu.memory_space<semaphore_mem>>
      tpu.enqueue_dma source(%95 : memref<1x128xf32, #tpu.memory_space<any>>) target(%97 : memref<1x128xf32, #tpu.memory_space<vmem>>) target_semaphore(%99 : memref<!tpu.dma_semaphore, #tpu.memory_space<semaphore_mem>>)
      %c8_i32_43 = arith.constant 8 : i32
      %100 = arith.muli %55, %c8_i32_43 : i32
      %c4_i32 = arith.constant 4 : i32
      %101 = arith.addi %100, %c4_i32 : i32
      %102 = arith.addi %2, %101 : i32
      %103 = arith.index_cast %52 : i32 to index
      %104 = arith.index_cast %102 : i32 to index
      %105 = memref.load %arg2[%103, %104] : memref<2x8xi32, #tpu.memory_space<smem>>
      %c0_i32_44 = arith.constant 0 : i32
      %106 = tpu.memref_slice %arg3[%105, %c0_i32_44] : memref<96x128xf32, #tpu.memory_space<any>> -> memref<1x128xf32, #tpu.memory_space<any>>
      %c0_i32_45 = arith.constant 0 : i32
      %107 = tpu.memref_slice %arg8[%53, %101, %c0_i32_45] : memref<2x8x128xf32, #tpu.memory_space<vmem>> -> memref<1x1x128xf32, #tpu.memory_space<vmem>>
      %108 = tpu.memref_squeeze %107 : memref<1x1x128xf32, #tpu.memory_space<vmem>> -> memref<1x128xf32, #tpu.memory_space<vmem>>
      %109 = tpu.memref_slice %arg9[%53] : memref<2x!tpu.dma_semaphore, #tpu.memory_space<semaphore_mem>> -> memref<1x!tpu.dma_semaphore, #tpu.memory_space<semaphore_mem>>
      %110 = tpu.memref_squeeze %109 : memref<1x!tpu.dma_semaphore, #tpu.memory_space<semaphore_mem>> -> memref<!tpu.dma_semaphore, #tpu.memory_space<semaphore_mem>>
      tpu.enqueue_dma source(%106 : memref<1x128xf32, #tpu.memory_space<any>>) target(%108 : memref<1x128xf32, #tpu.memory_space<vmem>>) target_semaphore(%110 : memref<!tpu.dma_semaphore, #tpu.memory_space<semaphore_mem>>)
      %c8_i32_46 = arith.constant 8 : i32
      %111 = arith.muli %55, %c8_i32_46 : i32
      %c5_i32 = arith.constant 5 : i32
      %112 = arith.addi %111, %c5_i32 : i32
      %113 = arith.addi %2, %112 : i32
      %114 = arith.index_cast %52 : i32 to index
      %115 = arith.index_cast %113 : i32 to index
      %116 = memref.load %arg2[%114, %115] : memref<2x8xi32, #tpu.memory_space<smem>>
      %c0_i32_47 = arith.constant 0 : i32
      %117 = tpu.memref_slice %arg3[%116, %c0_i32_47] : memref<96x128xf32, #tpu.memory_space<any>> -> memref<1x128xf32, #tpu.memory_space<any>>
      %c0_i32_48 = arith.constant 0 : i32
      %118 = tpu.memref_slice %arg8[%53, %112, %c0_i32_48] : memref<2x8x128xf32, #tpu.memory_space<vmem>> -> memref<1x1x128xf32, #tpu.memory_space<vmem>>
      %119 = tpu.memref_squeeze %118 : memref<1x1x128xf32, #tpu.memory_space<vmem>> -> memref<1x128xf32, #tpu.memory_space<vmem>>
      %120 = tpu.memref_slice %arg9[%53] : memref<2x!tpu.dma_semaphore, #tpu.memory_space<semaphore_mem>> -> memref<1x!tpu.dma_semaphore, #tpu.memory_space<semaphore_mem>>
      %121 = tpu.memref_squeeze %120 : memref<1x!tpu.dma_semaphore, #tpu.memory_space<semaphore_mem>> -> memref<!tpu.dma_semaphore, #tpu.memory_space<semaphore_mem>>
      tpu.enqueue_dma source(%117 : memref<1x128xf32, #tpu.memory_space<any>>) target(%119 : memref<1x128xf32, #tpu.memory_space<vmem>>) target_semaphore(%121 : memref<!tpu.dma_semaphore, #tpu.memory_space<semaphore_mem>>)
      %c8_i32_49 = arith.constant 8 : i32
      %122 = arith.muli %55, %c8_i32_49 : i32
      %c6_i32 = arith.constant 6 : i32
      %123 = arith.addi %122, %c6_i32 : i32
      %124 = arith.addi %2, %123 : i32
      %125 = arith.index_cast %52 : i32 to index
      %126 = arith.index_cast %124 : i32 to index
      %127 = memref.load %arg2[%125, %126] : memref<2x8xi32, #tpu.memory_space<smem>>
      %c0_i32_50 = arith.constant 0 : i32
      %128 = tpu.memref_slice %arg3[%127, %c0_i32_50] : memref<96x128xf32, #tpu.memory_space<any>> -> memref<1x128xf32, #tpu.memory_space<any>>
      %c0_i32_51 = arith.constant 0 : i32
      %129 = tpu.memref_slice %arg8[%53, %123, %c0_i32_51] : memref<2x8x128xf32, #tpu.memory_space<vmem>> -> memref<1x1x128xf32, #tpu.memory_space<vmem>>
      %130 = tpu.memref_squeeze %129 : memref<1x1x128xf32, #tpu.memory_space<vmem>> -> memref<1x128xf32, #tpu.memory_space<vmem>>
      %131 = tpu.memref_slice %arg9[%53] : memref<2x!tpu.dma_semaphore, #tpu.memory_space<semaphore_mem>> -> memref<1x!tpu.dma_semaphore, #tpu.memory_space<semaphore_mem>>
      %132 = tpu.memref_squeeze %131 : memref<1x!tpu.dma_semaphore, #tpu.memory_space<semaphore_mem>> -> memref<!tpu.dma_semaphore, #tpu.memory_space<semaphore_mem>>
      tpu.enqueue_dma source(%128 : memref<1x128xf32, #tpu.memory_space<any>>) target(%130 : memref<1x128xf32, #tpu.memory_space<vmem>>) target_semaphore(%132 : memref<!tpu.dma_semaphore, #tpu.memory_space<semaphore_mem>>)
      %c8_i32_52 = arith.constant 8 : i32
      %133 = arith.muli %55, %c8_i32_52 : i32
      %c7_i32 = arith.constant 7 : i32
      %134 = arith.addi %133, %c7_i32 : i32
      %135 = arith.addi %2, %134 : i32
      %136 = arith.index_cast %52 : i32 to index
      %137 = arith.index_cast %135 : i32 to index
      %138 = memref.load %arg2[%136, %137] : memref<2x8xi32, #tpu.memory_space<smem>>
      %c0_i32_53 = arith.constant 0 : i32
      %139 = tpu.memref_slice %arg3[%138, %c0_i32_53] : memref<96x128xf32, #tpu.memory_space<any>> -> memref<1x128xf32, #tpu.memory_space<any>>
      %c0_i32_54 = arith.constant 0 : i32
      %140 = tpu.memref_slice %arg8[%53, %134, %c0_i32_54] : memref<2x8x128xf32, #tpu.memory_space<vmem>> -> memref<1x1x128xf32, #tpu.memory_space<vmem>>
      %141 = tpu.memref_squeeze %140 : memref<1x1x128xf32, #tpu.memory_space<vmem>> -> memref<1x128xf32, #tpu.memory_space<vmem>>
      %142 = tpu.memref_slice %arg9[%53] : memref<2x!tpu.dma_semaphore, #tpu.memory_space<semaphore_mem>> -> memref<1x!tpu.dma_semaphore, #tpu.memory_space<semaphore_mem>>
      %143 = tpu.memref_squeeze %142 : memref<1x!tpu.dma_semaphore, #tpu.memory_space<semaphore_mem>> -> memref<!tpu.dma_semaphore, #tpu.memory_space<semaphore_mem>>
      tpu.enqueue_dma source(%139 : memref<1x128xf32, #tpu.memory_space<any>>) target(%141 : memref<1x128xf32, #tpu.memory_space<vmem>>) target_semaphore(%143 : memref<!tpu.dma_semaphore, #tpu.memory_space<semaphore_mem>>)
      %c1_i32_55 = arith.constant 1 : i32
    } else {
    }
    %15 = arith.index_cast %0 : i32 to index
    %c0 = arith.constant 0 : index
    %c0_7 = arith.constant 0 : index
    %16 = vector.load %arg8[%15, %c0, %c0_7] : memref<2x8x128xf32, #tpu.memory_space<vmem>>, vector<1x8x128xf32>
    %17 = vector.shape_cast %16 : vector<1x8x128xf32> to vector<8x128xf32>
    %c0_8 = arith.constant 0 : index
    %c0_9 = arith.constant 0 : index
    %18 = vector.load %arg4[%c0_8, %c0_9] : memref<8x128xf32, #tpu.memory_space<vmem>>, vector<8x128xf32>
    %19 = arith.addf %17, %18 : vector<8x128xf32>
    %20 = tpu.iota {dimensions = array<i32: 1>} : vector<8x128xi32>
    %c32_i32 = arith.constant 32 : i32
    %21 = vector.broadcast %c32_i32 : i32 to vector<8x128xi32>
    %22 = arith.cmpi slt, %20, %21 : vector<8x128xi32>
    %cst = arith.constant 0.000000e+00 : f32
    %23 = vector.broadcast %cst : f32 to vector<8x128xf32>
    %24 = arith.select %22, %19, %23 : vector<8x128xi1>, vector<8x128xf32>
    %cst_10 = arith.constant dense<0.000000e+00> : vector<8xf32>
    %25 = vector.multi_reduction <add>, %24, %cst_10 [1] : vector<8x128xf32> to vector<8xf32>
    %26 = vector.shape_cast %25 : vector<8xf32> to vector<8x1xf32>
    %cst_11 = arith.constant 3.125000e-02 : f32
    %27 = vector.broadcast %cst_11 : f32 to vector<8x1xf32>
    %28 = arith.mulf %26, %27 : vector<8x1xf32>
    %29 = vector.broadcast %28 : vector<8x1xf32> to vector<8x128xf32>
    %30 = arith.subf %19, %29 : vector<8x128xf32>
    %cst_12 = arith.constant 0.000000e+00 : f32
    %31 = vector.broadcast %cst_12 : f32 to vector<8x128xf32>
    %32 = arith.select %22, %30, %31 : vector<8x128xi1>, vector<8x128xf32>
    %33 = arith.mulf %32, %32 : vector<8x128xf32>
    %cst_13 = arith.constant dense<0.000000e+00> : vector<8xf32>
    %34 = vector.multi_reduction <add>, %33, %cst_13 [1] : vector<8x128xf32> to vector<8xf32>
    %35 = vector.shape_cast %34 : vector<8xf32> to vector<8x1xf32>
    %cst_14 = arith.constant 3.125000e-02 : f32
    %36 = vector.broadcast %cst_14 : f32 to vector<8x1xf32>
    %37 = arith.mulf %35, %36 : vector<8x1xf32>
    %cst_15 = arith.constant 9.99999996E-13 : f32
    %38 = vector.broadcast %cst_15 : f32 to vector<8x1xf32>
    %39 = arith.addf %37, %38 : vector<8x1xf32>
    %40 = math.rsqrt %39 : vector<8x1xf32>
    %41 = vector.broadcast %40 : vector<8x1xf32> to vector<8x128xf32>
    %42 = arith.mulf %32, %41 : vector<8x128xf32>
    %c0_16 = arith.constant 0 : index
    %c0_17 = arith.constant 0 : index
    %43 = vector.load %arg5[%c0_16, %c0_17] : memref<1x128xf32, #tpu.memory_space<vmem>>, vector<1x128xf32>
    %44 = vector.broadcast %43 : vector<1x128xf32> to vector<8x128xf32>
    %45 = arith.mulf %42, %44 : vector<8x128xf32>
    %c0_18 = arith.constant 0 : index
    %c0_19 = arith.constant 0 : index
    %46 = vector.load %arg6[%c0_18, %c0_19] : memref<1x128xf32, #tpu.memory_space<vmem>>, vector<1x128xf32>
    %47 = vector.broadcast %46 : vector<1x128xf32> to vector<8x128xf32>
    %48 = arith.addf %45, %47 : vector<8x128xf32>
    %c0_20 = arith.constant 0 : index
    %c0_21 = arith.constant 0 : index
    %c0_22 = arith.constant 0 : index
    %49 = vector.load %arg7[%c0_20, %c0_21, %c0_22] : memref<1x8x128xf32, #tpu.memory_space<vmem>>, vector<1x8x128xf32>
    %50 = vector.shape_cast %49 : vector<1x8x128xf32> to vector<8x128xf32>
    %51 = vector.shape_cast %48 : vector<8x128xf32> to vector<1x8x128xf32>
    tpu.vector_store %arg7[%c0_20, %c0_21, %c0_22], %51 {strides = array<i32>} : memref<1x8x128xf32, #tpu.memory_space<vmem>>, vector<1x8x128xf32>,
    return
  }
  func.func @transform_1(%arg0: i32, %arg1: i32, %arg2: memref<2x8xi32, #tpu.memory_space<smem>>) -> (i32, i32) {
    %c0_i32 = arith.constant 0 : i32
    %c0_i32_0 = arith.constant 0 : i32
    return %arg0, %c0_i32 : i32, i32
  }
  func.func @transform_2(%arg0: i32, %arg1: i32, %arg2: memref<2x8xi32, #tpu.memory_space<smem>>) -> (i32, i32) {
    %c0_i32 = arith.constant 0 : i32
    %c0_i32_0 = arith.constant 0 : i32
    %c0_i32_1 = arith.constant 0 : i32
    return %c0_i32, %c0_i32_0 : i32, i32
  }
  func.func @transform_3(%arg0: i32, %arg1: i32, %arg2: memref<2x8xi32, #tpu.memory_space<smem>>) -> (i32, i32) {
    %c0_i32 = arith.constant 0 : i32
    %c0_i32_0 = arith.constant 0 : i32
    %c0_i32_1 = arith.constant 0 : i32
    return %c0_i32, %c0_i32_0 : i32, i32
  }
  func.func @transform_4(%arg0: i32, %arg1: i32, %arg2: memref<2x8xi32, #tpu.memory_space<smem>>) -> (i32, i32, i32) {
    %c0_i32 = arith.constant 0 : i32
    %c0_i32_0 = arith.constant 0 : i32
    return %arg1, %arg0, %c0_i32 : i32, i32, i32
  }
}

</mosaic_0001>

<llo_original>
// kernel: tpu_custom_call.1
$region0: #{tpu_custom_call.1}
  #allocation0 [shape = 'u32[]', space=smem, size = 0x4, offset = 0x4, fixed_abs, tag = 'smem constant byte address 0x4 - core index']
  #allocation1 [shape = 'u32[72,128]{1,0:T(1,128)}', space=vmem, size = 0x9000, scoped, tag = 'internal scratch']
  #allocation2 [shape = 'f32[2,8,128]{2,1,0:T(8,128)}', space=vmem, size = 0x2000, scoped, tag = 'scratch operand']
  #allocation3 [shape = 's32[2]{0}', space=sflag, size = 0x8, scoped, tag = 'scratch operand']
  #allocation4 [shape = 's32[1]{0}', space=sflag, size = 0x4, scoped, tag = 'scoped memory for tpu_custom_call.1']
  #allocation5 [shape = 'u8[1024]{0}', space=smem, size = 0x400, scoped, tag = 'prefetched SMEM operand 0']
  #allocation10 [shape = 's32[]', space=sflag, size = 0x4, offset = 0, fixed_abs, tag = 'sflag constant byte address 0x0 - dummy sync flag']
  #allocation11 [shape = 's32[]', space=sflag, size = 0x4, offset = 0, fixed_abs, tag = 'sflag constant byte address 0x0 - dummy sync flag']
  #allocation12 [shape = 'u32[]', space=smem, size = 0x4, offset = 0x44, fixed_abs, tag = 'smem constant byte address 0x44 - assertion arg 0']
  #allocation13 [shape = 'u32[]', space=smem, size = 0x4, offset = 0x48, fixed_abs, tag = 'smem constant byte address 0x48 - assertion arg 1']
  #allocation14 [shape = 's32[]', space=sflag, size = 0x4, offset = 0, fixed_abs, tag = 'sflag constant byte address 0x0 - dummy sync flag']
  #allocation15 [shape = 's32[]', space=sflag, size = 0x4, offset = 0, fixed_abs, tag = 'sflag constant byte address 0x0 - dummy sync flag']
  #allocation16 [shape = 's32[]', space=sflag, size = 0x4, offset = 0, fixed_abs, tag = 'sflag constant byte address 0x0 - dummy sync flag']
  #allocation17 [shape = 's32[]', space=sflag, size = 0x4, offset = 0, fixed_abs, tag = 'sflag constant byte address 0x0 - dummy sync flag']
  #allocation18 [shape = 's32[]', space=sflag, size = 0x4, offset = 0, fixed_abs, tag = 'sflag constant byte address 0x0 - dummy sync flag']
  #allocation19 [shape = 's32[]', space=sflag, size = 0x4, offset = 0, fixed_abs, tag = 'sflag constant byte address 0x0 - dummy sync flag']
  #allocation20 [shape = 's32[]', space=sflag, size = 0x4, offset = 0, fixed_abs, tag = 'sflag constant byte address 0x0 - dummy sync flag']
  #allocation21 [shape = 's32[]', space=sflag, size = 0x4, offset = 0, fixed_abs, tag = 'sflag constant byte address 0x0 - dummy sync flag']
  #allocation22 [shape = 's32[]', space=sflag, size = 0x4, offset = 0, fixed_abs, tag = 'sflag constant byte address 0x0 - dummy sync flag']
  #allocation23 [shape = 's32[]', space=sflag, size = 0x4, offset = 0, fixed_abs, tag = 'sflag constant byte address 0x0 - dummy sync flag']
  #allocation24 [shape = 's32[]', space=sflag, size = 0x4, offset = 0, fixed_abs, tag = 'sflag constant byte address 0x0 - dummy sync flag']
  #allocation25 [shape = 's32[]', space=sflag, size = 0x4, offset = 0, fixed_abs, tag = 'sflag constant byte address 0x0 - dummy sync flag']
  #allocation26 [shape = 's32[]', space=sflag, size = 0x4, offset = 0, fixed_abs, tag = 'sflag constant byte address 0x0 - dummy sync flag']
  #allocation27 [shape = 's32[]', space=sflag, size = 0x4, offset = 0, fixed_abs, tag = 'sflag constant byte address 0x0 - dummy sync flag']
  #allocation28 [shape = 's32[]', space=sflag, size = 0x4, offset = 0, fixed_abs, tag = 'sflag constant byte address 0x0 - dummy sync flag']
  #allocation29 [shape = 's32[]', space=sflag, size = 0x4, offset = 0, fixed_abs, tag = 'sflag constant byte address 0x0 - dummy sync flag']
  #allocation30 [shape = 's32[]', space=sflag, size = 0x4, offset = 0, fixed_abs, tag = 'sflag constant byte address 0x0 - dummy sync flag']
  #allocation31 [shape = 's32[]', space=sflag, size = 0x4, offset = 0, fixed_abs, tag = 'sflag constant byte address 0x0 - dummy sync flag']
  #allocation32 [shape = 's32[]', space=sflag, size = 0x4, offset = 0, fixed_abs, tag = 'sflag constant byte address 0x0 - dummy sync flag']
  #allocation33 [shape = 's32[]', space=sflag, size = 0x4, offset = 0, fixed_abs, tag = 'sflag constant byte address 0x0 - dummy sync flag']
  #allocation34 [shape = 's32[]', space=sflag, size = 0x4, offset = 0, fixed_abs, tag = 'sflag constant byte address 0x0 - dummy sync flag']
  #allocation35 [shape = 's32[]', space=sflag, size = 0x4, offset = 0, fixed_abs, tag = 'sflag constant byte address 0x0 - dummy sync flag']
  #allocation36 [shape = 's32[]', space=sflag, size = 0x4, offset = 0, fixed_abs, tag = 'sflag constant byte address 0x0 - dummy sync flag']
  #allocation37 [shape = 's32[]', space=sflag, size = 0x4, offset = 0, fixed_abs, tag = 'sflag constant byte address 0x0 - dummy sync flag']
  #allocation38 [shape = 's32[]', space=sflag, size = 0x4, offset = 0, fixed_abs, tag = 'sflag constant byte address 0x0 - dummy sync flag']
  #allocation39 [shape = 's32[]', space=sflag, size = 0x4, offset = 0, fixed_abs, tag = 'sflag constant byte address 0x0 - dummy sync flag']
  #allocation40 [shape = 's32[]', space=sflag, size = 0x4, offset = 0, fixed_abs, tag = 'sflag constant byte address 0x0 - dummy sync flag']
  #allocation41 [shape = 's32[]', space=sflag, size = 0x4, offset = 0, fixed_abs, tag = 'sflag constant byte address 0x0 - dummy sync flag']
  #allocation42 [shape = 's32[]', space=sflag, size = 0x4, offset = 0, fixed_abs, tag = 'sflag constant byte address 0x0 - dummy sync flag']
  #allocation43 [shape = 's32[]', space=sflag, size = 0x4, offset = 0, fixed_abs, tag = 'sflag constant byte address 0x0 - dummy sync flag']
  %s0 = inlined_call_operand.hbm [shape: s32[2,8], index: 0, kind: input, shape index: {}]
  %s1 = inlined_call_operand.hbm [shape: f32[96,128], index: 1, kind: input, shape index: {}]
  %s2 = inlined_call_operand.hbm [shape: f32[8,128], index: 2, kind: input, shape index: {}]
  %s3 = inlined_call_operand.vmem [shape: f32[1,128], index: 3, kind: input, shape index: {}]
  %s4 = inlined_call_operand.vmem [shape: f32[1,128], index: 4, kind: input, shape index: {}]
  %s5 = inlined_call_operand.hbm [shape: f32[2,8,128], index: 5, kind: output, shape index: {}]
  %s6 = sld [smem:[#allocation0]]
  $region121: #{tpu_custom_call.1} parent=0
    _
  %s8 = ssub.s32 1, %s6
  %s9 = scalar_select 0, %s8, %s6
  %s11 = sshll.u32 %s0, 4
  %s12 = int_to_ptr.hbm [resolvable:$true] %s11
  %14 = dma.hbm_to_smem %s12, 32, [#allocation5], [#allocation4]
  %16 = dma.done [#allocation4], 32
  %17 = sfence
  $region1: #{tpu_custom_call.1} parent=0
    #allocation6 [shape = 'u8[4096]{0}', space=vmem, size = 0x1000, scoped, tag = 'input window, operand 2, single buffered']
    #allocation7 [shape = 's32[2]{0}', space=sflag, size = 0x8, scoped, tag = 'scoped memory for tpu_custom_call.1']
    #allocation8 [shape = 's32[2]{0}', space=sflag, size = 0x8, scoped, tag = 'scoped memory for tpu_custom_call.1']
    #allocation9 [shape = 'u8[8192]{0}', space=vmem, size = 0x2000, scoped, tag = 'output window, operand 0']
    %18 = vsyncpa [#allocation7], 0
    %19 = vsyncpa [#allocation8], 0
    %s20 = scalar_lea.sflag [#allocation8], 1
    %21 = vsyncpa %s20, 0
    loop: start=0, step=1, limit=4
    $region2: #{tpu_custom_call.1} parent=1 // loop_pre_header
      _
    $region3: #{tpu_custom_call.1} parent=1 // loop_header
      %s23 = sphi 0, %s27
      %p24 = scmp.ge.s32.totalorder %s23, 4
      %s30 = sphi 0, %s42
      %s31 = sphi 0, %s38
      %s32 = sphi 0, %s30
      %s33 = sphi 0, %s31
      %s34 = sphi 0, %s32
      %s35 = sphi 0, %s33
      %s45 = sphi 0, %s47
      %s48 = sphi 0, %s45
      %s49 = sphi 0, %s48
      %s65 = sphi 0, %s49
      %s69 = sphi 0, %s69
      %s71 = sphi 0, %s69
      %s72 = sphi 0, %s71
      %s86 = sphi 0, %s72
      %s90 = sphi 0, %s90
      %s92 = sphi 0, %s90
      %s93 = sphi 0, %s92
      %s107 = sphi 0, %s93
      %s115 = sphi 0, %s117
      %s118 = sphi 0, %s115
      %s119 = sphi 0, %s118
      %s135 = sphi 0, %s119
    $region4: #{tpu_custom_call.1} parent=1 // loop_header_branch
      %26 = sbr.rel (%p24) target = $region8
    $region5: #{tpu_custom_call.1} parent=1 // loop_body
      %s28 = ssub.s32 %s23, 1
      %s29 = ssub.s32 %s23, 2
      %s36 = sadd.s32 1, %s31
      %p37 = scmp.ge.s32.totalorder %s36, 2
      %s38 = scalar_select %p37, 0, %s36
      %s39 = sadd.s32 1, %s30
      %s40 = scalar_select %p37, %s39, %s30
      %p41 = scmp.ge.s32.totalorder %s40, 1
      %s42 = scalar_select %p41, 0, %s40
      %s43 = ssub.s32 %s30, %s42
      %p44 = scmp.eq.s32.totalorder %s43, 0
      %s46 = sadd.s32 %s45, 1
      %s47 = scalar_select %p44, %s45, %s46
      %p50 = pneg %p44
      %p51 = scmp.eq.s32.totalorder %s23, 1
      %p52 = por %p50, %p51
      %p53 = scmp.ne.s32.totalorder %s45, %s48
      %p54 = scmp.eq.s32.totalorder %s23, 0
      %p55 = por %p53, %p54
      %p56 = scmp.ne.s32.totalorder %s45, %s48
      %p57 = scmp.eq.s32.totalorder %s28, 1
      %p58 = por %p56, %p57
      %p59 = scmp.ne.s32.totalorder %s48, %s49
      %p60 = scmp.eq.s32.totalorder %s28, 0
      %p61 = por %p59, %p60
      %p62 = scmp.ne.s32.totalorder %s48, %s49
      %p63 = scmp.eq.s32.totalorder %s29, 1
      %p64 = por %p62, %p63
      %p66 = scmp.ne.s32.totalorder %s49, %s65
      %p67 = scmp.eq.s32.totalorder %s29, 0
      %p68 = por %p66, %p67
      %s70 = sadd.s32 %s69, 1
      %p73 = scmp.eq.s32.totalorder %s23, 1
      %p74 = scmp.ne.s32.totalorder %s69, %s71
      %p75 = scmp.eq.s32.totalorder %s23, 0
      %p76 = por %p74, %p75
      %p77 = scmp.ne.s32.totalorder %s69, %s71
      %p78 = scmp.eq.s32.totalorder %s28, 1
      %p79 = por %p77, %p78
      %p80 = scmp.ne.s32.totalorder %s71, %s72
      %p81 = scmp.eq.s32.totalorder %s28, 0
      %p82 = por %p80, %p81
      %p83 = scmp.ne.s32.totalorder %s71, %s72
      %p84 = scmp.eq.s32.totalorder %s29, 1
      %p85 = por %p83, %p84
      %p87 = scmp.ne.s32.totalorder %s72, %s86
      %p88 = scmp.eq.s32.totalorder %s29, 0
      %p89 = por %p87, %p88
      %s91 = sadd.s32 %s90, 1
      %p94 = scmp.eq.s32.totalorder %s23, 1
      %p95 = scmp.ne.s32.totalorder %s90, %s92
      %p96 = scmp.eq.s32.totalorder %s23, 0
      %p97 = por %p95, %p96
      %p98 = scmp.ne.s32.totalorder %s90, %s92
      %p99 = scmp.eq.s32.totalorder %s28, 1
      %p100 = por %p98, %p99
      %p101 = scmp.ne.s32.totalorder %s92, %s93
      %p102 = scmp.eq.s32.totalorder %s28, 0
      %p103 = por %p101, %p102
      %p104 = scmp.ne.s32.totalorder %s92, %s93
      %p105 = scmp.eq.s32.totalorder %s29, 1
      %p106 = por %p104, %p105
      %p108 = scmp.ne.s32.totalorder %s93, %s107
      %p109 = scmp.eq.s32.totalorder %s29, 0
      %p110 = por %p108, %p109
      %s111 = ssub.s32 %s31, %s38
      %s112 = ssub.s32 %s30, %s42
      %s113 = sor.u32 %s111, %s112
      %p114 = scmp.eq.s32.totalorder %s113, 0
      %s116 = sadd.s32 %s115, 1
      %s117 = scalar_select %p114, %s115, %s116
      %p120 = pneg %p114
      %p121 = scmp.eq.s32.totalorder %s23, 1
      %p122 = por %p120, %p121
      %p123 = scmp.ne.s32.totalorder %s115, %s118
      %p124 = scmp.eq.s32.totalorder %s23, 0
      %p125 = por %p123, %p124
      %p126 = scmp.ne.s32.totalorder %s115, %s118
      %p127 = scmp.eq.s32.totalorder %s28, 1
      %p128 = por %p126, %p127
      %p129 = scmp.ne.s32.totalorder %s118, %s119
      %p130 = scmp.eq.s32.totalorder %s28, 0
      %p131 = por %p129, %p130
      %p132 = scmp.ne.s32.totalorder %s118, %s119
      %p133 = scmp.eq.s32.totalorder %s29, 1
      %p134 = por %p132, %p133
      %p136 = scmp.ne.s32.totalorder %s119, %s135
      %p137 = scmp.eq.s32.totalorder %s29, 0
      %p138 = por %p136, %p137
      %p139 = scmp.le.s32.totalorder 1, %s23
      %p140 = scmp.lt.s32.totalorder %s23, 3
      %p141 = pnand %p139, %p140
      %p142 = pneg %p141
      // Predicated region
      $region9: #{tpu_custom_call.1} parent=5 // pred_check
        _
      $region10: #{tpu_custom_call.1} parent=5 // pred_check_branch
        %144 = sbr.rel (%p141) target = $region12
      $region11: #{tpu_custom_call.1} parent=5 // pred_region
        %s145 = ssub.s32 %s23, 1
        // Predicated region
        $region13: #{tpu_custom_call.1} parent=11 // pred_check
          %p146 = pneg %p61
        $region14: #{tpu_custom_call.1} parent=11 // pred_check_branch
          %148 = sbr.rel (%p146) target = $region16
        $region15: #{tpu_custom_call.1} parent=11 // pred_region
          %150 = vsyncadd [#allocation7], 0
          %s151 = smul.addr %s32, 8
          %s152 = scalar_lea.hbm %s2, %s151
          %s154 = sshll.u32 %s152, 4
          %s155 = int_to_ptr.hbm [resolvable:$true] %s154
          %s156 = sshll.u32 [#allocation6], 4
          %s157 = int_to_ptr.vmem [resolvable:$true] %s156
          %159 = dma.hbm_to_vmem [thread:$0]  %s155, 128, %s157, [#allocation7]
        $region16: #{tpu_custom_call.1} parent=11 // pred_fallthru
          _
        // Predicated region
        $region17: #{tpu_custom_call.1} parent=11 // pred_check
          %p160 = pneg %p82
        $region18: #{tpu_custom_call.1} parent=11 // pred_check_branch
          %162 = sbr.rel (%p160) target = $region20
        $region19: #{tpu_custom_call.1} parent=11 // pred_region
          _
        $region20: #{tpu_custom_call.1} parent=11 // pred_fallthru
          _
        // Predicated region
        $region21: #{tpu_custom_call.1} parent=11 // pred_check
          %p163 = pneg %p103
        $region22: #{tpu_custom_call.1} parent=11 // pred_check_branch
          %165 = sbr.rel (%p163) target = $region24
        $region23: #{tpu_custom_call.1} parent=11 // pred_region
          _
        $region24: #{tpu_custom_call.1} parent=11 // pred_fallthru
          _
      $region12: #{tpu_custom_call.1} parent=5 // pred_fallthru
        _
      %p166 = scmp.lt.s32.totalorder %s23, 2
      // Predicated region
      $region25: #{tpu_custom_call.1} parent=5 // pred_check
        %p167 = pneg %p166
      $region26: #{tpu_custom_call.1} parent=5 // pred_check_branch
        %169 = sbr.rel (%p167) target = $region28
      $region27: #{tpu_custom_call.1} parent=5 // pred_region
        _
      $region28: #{tpu_custom_call.1} parent=5 // pred_fallthru
        _
      %p170 = scmp.le.s32.totalorder 1, %s23
      %p171 = scmp.lt.s32.totalorder %s23, 3
      %p172 = pnand %p170, %p171
      %p173 = pneg %p172
      // Predicated region
      $region29: #{tpu_custom_call.1} parent=5 // pred_check
        _
      $region30: #{tpu_custom_call.1} parent=5 // pred_check_branch
        %175 = sbr.rel (%p172) target = $region32
      $region31: #{tpu_custom_call.1} parent=5 // pred_region
        %s176 = ssub.s32 %s23, 1
        // Predicated region
        $region33: #{tpu_custom_call.1} parent=31 // pred_check
          %p177 = pneg %p61
        $region34: #{tpu_custom_call.1} parent=31 // pred_check_branch
          %179 = sbr.rel (%p177) target = $region36
        $region35: #{tpu_custom_call.1} parent=31 // pred_region
          %181 = dma.done [#allocation7], 128
        $region36: #{tpu_custom_call.1} parent=31 // pred_fallthru
          _
        %p182 = pneg %p61
        %p183 = pneg %p58
        %p184 = pneg %p82
        %p185 = pneg %p79
        %p186 = pneg %p103
        %p187 = pneg %p100
        %p188 = pneg %p131
        %p189 = pneg %p128
        %s190 = sand.u32 %s118, 1
        %s191 = scalar_lea.sflag [#allocation8], %s190
        %s192 = sand.u32 %s118, 1
        %s193 = smul.addr %s192, 8
        %s194 = scalar_lea.vmem [#allocation9], %s193
        %s195 = sand.u32 %s33, 1
        %s196 = smul.u32 %s32, 8
        %p197 = scmp.eq.s32.totalorder %s33, 0
        // Predicated region
        $region37: #{tpu_custom_call.1} parent=31 // pred_check
          %p198 = pneg %p197
        $region38: #{tpu_custom_call.1} parent=31 // pred_check_branch
          %200 = sbr.rel (%p198) target = $region40
        $region39: #{tpu_custom_call.1} parent=31 // pred_region
          %s201 = sld [smem:[#allocation5 + %s196]]
          %s202 = scalar_lea.hbm %s1, %s201
          %s203 = smul.u32 %s195, 8
          %s204 = scalar_lea.vmem [#allocation2], %s203
          %s205 = scalar_lea.sflag [#allocation3], %s195
          // Predicated region
          $region41: #{tpu_custom_call.1} parent=39 // pred_check
            _
          $region42: #{tpu_custom_call.1} parent=39 // pred_check_branch
            %207 = sbr.rel target = $region44
          $region43: #{tpu_custom_call.1} parent=39 // pred_region
            %208 = sst [smem:[#allocation12]] [#allocation11]
            %209 = sst [smem:[#allocation13]] [#allocation10]
          $region44: #{tpu_custom_call.1} parent=39 // pred_fallthru
            _
          %211 = shalt.err (0)
          %s213 = sshll.u32 %s202, 4
          %s214 = int_to_ptr.hbm [resolvable:$true] %s213
          %s215 = sshll.u32 %s204, 4
          %s216 = int_to_ptr.vmem [resolvable:$true] %s215
          %218 = dma.hbm_to_vmem [thread:$0]  %s214, 16, %s216, %s205
          %s219 = sadd.s32 %s196, 1
          %s220 = sld [smem:[#allocation5 + %s219]]
          %s221 = scalar_lea.hbm %s1, %s220
          %s222 = sadd.s32 1, %s203
          %s223 = scalar_lea.vmem [#allocation2], %s222
          // Predicated region
          $region45: #{tpu_custom_call.1} parent=39 // pred_check
            _
          $region46: #{tpu_custom_call.1} parent=39 // pred_check_branch
            %225 = sbr.rel target = $region48
          $region47: #{tpu_custom_call.1} parent=39 // pred_region
            %226 = sst [smem:[#allocation12]] [#allocation15]
            %227 = sst [smem:[#allocation13]] [#allocation14]
          $region48: #{tpu_custom_call.1} parent=39 // pred_fallthru
            _
          %229 = shalt.err (0)
          %s231 = sshll.u32 %s221, 4
          %s232 = int_to_ptr.hbm [resolvable:$true] %s231
          %s233 = sshll.u32 %s223, 4
          %s234 = int_to_ptr.vmem [resolvable:$true] %s233
          %236 = dma.hbm_to_vmem [thread:$0]  %s232, 16, %s234, %s205
          %s237 = sadd.s32 %s196, 2
          %s238 = sld [smem:[#allocation5 + %s237]]
          %s239 = scalar_lea.hbm %s1, %s238
          %s240 = sadd.s32 2, %s203
          %s241 = scalar_lea.vmem [#allocation2], %s240
          // Predicated region
          $region49: #{tpu_custom_call.1} parent=39 // pred_check
            _
          $region50: #{tpu_custom_call.1} parent=39 // pred_check_branch
            %243 = sbr.rel target = $region52
          $region51: #{tpu_custom_call.1} parent=39 // pred_region
            %244 = sst [smem:[#allocation12]] [#allocation17]
            %245 = sst [smem:[#allocation13]] [#allocation16]
          $region52: #{tpu_custom_call.1} parent=39 // pred_fallthru
            _
          %247 = shalt.err (0)
          %s249 = sshll.u32 %s239, 4
          %s250 = int_to_ptr.hbm [resolvable:$true] %s249
          %s251 = sshll.u32 %s241, 4
          %s252 = int_to_ptr.vmem [resolvable:$true] %s251
          %254 = dma.hbm_to_vmem [thread:$0]  %s250, 16, %s252, %s205
          %s255 = sadd.s32 %s196, 3
          %s256 = sld [smem:[#allocation5 + %s255]]
          %s257 = scalar_lea.hbm %s1, %s256
          %s258 = sadd.s32 3, %s203
          %s259 = scalar_lea.vmem [#allocation2], %s258
          // Predicated region
          $region53: #{tpu_custom_call.1} parent=39 // pred_check
            _
          $region54: #{tpu_custom_call.1} parent=39 // pred_check_branch
            %261 = sbr.rel target = $region56
          $region55: #{tpu_custom_call.1} parent=39 // pred_region
            %262 = sst [smem:[#allocation12]] [#allocation19]
            %263 = sst [smem:[#allocation13]] [#allocation18]
          $region56: #{tpu_custom_call.1} parent=39 // pred_fallthru
            _
          %265 = shalt.err (0)
          %s267 = sshll.u32 %s257, 4
          %s268 = int_to_ptr.hbm [resolvable:$true] %s267
          %s269 = sshll.u32 %s259, 4
          %s270 = int_to_ptr.vmem [resolvable:$true] %s269
          %272 = dma.hbm_to_vmem [thread:$0]  %s268, 16, %s270, %s205
          %s273 = sadd.s32 %s196, 4
          %s274 = sld [smem:[#allocation5 + %s273]]
          %s275 = scalar_lea.hbm %s1, %s274
          %s276 = sadd.s32 4, %s203
          %s277 = scalar_lea.vmem [#allocation2], %s276
          // Predicated region
          $region57: #{tpu_custom_call.1} parent=39 // pred_check
            _
          $region58: #{tpu_custom_call.1} parent=39 // pred_check_branch
            %279 = sbr.rel target = $region60
          $region59: #{tpu_custom_call.1} parent=39 // pred_region
            %280 = sst [smem:[#allocation12]] [#allocation21]
            %281 = sst [smem:[#allocation13]] [#allocation20]
          $region60: #{tpu_custom_call.1} parent=39 // pred_fallthru
            _
          %283 = shalt.err (0)
          %s285 = sshll.u32 %s275, 4
          %s286 = int_to_ptr.hbm [resolvable:$true] %s285
          %s287 = sshll.u32 %s277, 4
          %s288 = int_to_ptr.vmem [resolvable:$true] %s287
          %290 = dma.hbm_to_vmem [thread:$0]  %s286, 16, %s288, %s205
          %s291 = sadd.s32 %s196, 5
          %s292 = sld [smem:[#allocation5 + %s291]]
          %s293 = scalar_lea.hbm %s1, %s292
          %s294 = sadd.s32 5, %s203
          %s295 = scalar_lea.vmem [#allocation2], %s294
          // Predicated region
          $region61: #{tpu_custom_call.1} parent=39 // pred_check
            _
          $region62: #{tpu_custom_call.1} parent=39 // pred_check_branch
            %297 = sbr.rel target = $region64
          $region63: #{tpu_custom_call.1} parent=39 // pred_region
            %298 = sst [smem:[#allocation12]] [#allocation23]
            %299 = sst [smem:[#allocation13]] [#allocation22]
          $region64: #{tpu_custom_call.1} parent=39 // pred_fallthru
            _
          %301 = shalt.err (0)
          %s303 = sshll.u32 %s293, 4
          %s304 = int_to_ptr.hbm [resolvable:$true] %s303
          %s305 = sshll.u32 %s295, 4
          %s306 = int_to_ptr.vmem [resolvable:$true] %s305
          %308 = dma.hbm_to_vmem [thread:$0]  %s304, 16, %s306, %s205
          %s309 = sadd.s32 %s196, 6
          %s310 = sld [smem:[#allocation5 + %s309]]
          %s311 = scalar_lea.hbm %s1, %s310
          %s312 = sadd.s32 6, %s203
          %s313 = scalar_lea.vmem [#allocation2], %s312
          // Predicated region
          $region65: #{tpu_custom_call.1} parent=39 // pred_check
            _
          $region66: #{tpu_custom_call.1} parent=39 // pred_check_branch
            %315 = sbr.rel target = $region68
          $region67: #{tpu_custom_call.1} parent=39 // pred_region
            %316 = sst [smem:[#allocation12]] [#allocation25]
            %317 = sst [smem:[#allocation13]] [#allocation24]
          $region68: #{tpu_custom_call.1} parent=39 // pred_fallthru
            _
          %319 = shalt.err (0)
          %s321 = sshll.u32 %s311, 4
          %s322 = int_to_ptr.hbm [resolvable:$true] %s321
          %s323 = sshll.u32 %s313, 4
          %s324 = int_to_ptr.vmem [resolvable:$true] %s323
          %326 = dma.hbm_to_vmem [thread:$0]  %s322, 16, %s324, %s205
          %s327 = sadd.s32 %s196, 7
          %s328 = sld [smem:[#allocation5 + %s327]]
          %s329 = scalar_lea.hbm %s1, %s328
          %s330 = sadd.s32 7, %s203
          %s331 = scalar_lea.vmem [#allocation2], %s330
          // Predicated region
          $region69: #{tpu_custom_call.1} parent=39 // pred_check
            _
          $region70: #{tpu_custom_call.1} parent=39 // pred_check_branch
            %333 = sbr.rel target = $region72
          $region71: #{tpu_custom_call.1} parent=39 // pred_region
            %334 = sst [smem:[#allocation12]] [#allocation27]
            %335 = sst [smem:[#allocation13]] [#allocation26]
          $region72: #{tpu_custom_call.1} parent=39 // pred_fallthru
            _
          %337 = shalt.err (0)
          %s339 = sshll.u32 %s329, 4
          %s340 = int_to_ptr.hbm [resolvable:$true] %s339
          %s341 = sshll.u32 %s331, 4
          %s342 = int_to_ptr.vmem [resolvable:$true] %s341
          %344 = dma.hbm_to_vmem [thread:$0]  %s340, 16, %s342, %s205
        $region40: #{tpu_custom_call.1} parent=31 // pred_fallthru
          _
        %s345 = smul.u32 %s195, 8
        %s346 = scalar_lea.vmem [#allocation2], %s345
        %s347 = scalar_lea.sflag [#allocation3], %s195
        %s348 = smul.u32 8, 1
        %s349 = sshll.u32 %s348, 4
        %350 = dma.done %s347, %s349
        %s351 = sadd.s32 %s33, 1
        %p352 = scmp.lt.s32.totalorder %s351, 2
        // Predicated region
        $region73: #{tpu_custom_call.1} parent=31 // pred_check
          %p353 = pneg %p352
        $region74: #{tpu_custom_call.1} parent=31 // pred_check_branch
          %355 = sbr.rel (%p353) target = $region76
        $region75: #{tpu_custom_call.1} parent=31 // pred_region
          %s356 = ssub.s32 1, %s195
          %s357 = sshra.s32 %s196, 7
          %s358 = sand.u32 %s196, 127
          %s359 = sadd.s32 %s357, %s351
          %s360 = smul.u32 %s359, 128
          %s361 = sshra.s32 %s196, 7
          %s362 = sand.u32 %s196, 127
          %s363 = sadd.s32 %s360, %s362
          %s364 = sld [smem:[#allocation5 + %s363]]
          %s365 = scalar_lea.hbm %s1, %s364
          %s366 = smul.u32 %s356, 8
          %s367 = scalar_lea.vmem [#allocation2], %s366
          %s368 = scalar_lea.sflag [#allocation3], %s356
          // Predicated region
          $region77: #{tpu_custom_call.1} parent=75 // pred_check
            _
          $region78: #{tpu_custom_call.1} parent=75 // pred_check_branch
            %370 = sbr.rel target = $region80
          $region79: #{tpu_custom_call.1} parent=75 // pred_region
            %371 = sst [smem:[#allocation12]] [#allocation29]
            %372 = sst [smem:[#allocation13]] [#allocation28]
          $region80: #{tpu_custom_call.1} parent=75 // pred_fallthru
            _
          %374 = shalt.err (0)
          %s376 = sshll.u32 %s365, 4
          %s377 = int_to_ptr.hbm [resolvable:$true] %s376
          %s378 = sshll.u32 %s367, 4
          %s379 = int_to_ptr.vmem [resolvable:$true] %s378
          %381 = dma.hbm_to_vmem [thread:$0]  %s377, 16, %s379, %s368
          %s382 = sadd.s32 %s196, 1
          %s383 = sshra.s32 %s382, 7
          %s384 = sand.u32 %s382, 127
          %s385 = sadd.s32 %s383, %s351
          %s386 = smul.u32 %s385, 128
          %s387 = sshra.s32 %s382, 7
          %s388 = sand.u32 %s382, 127
          %s389 = sadd.s32 %s386, %s388
          %s390 = sld [smem:[#allocation5 + %s389]]
          %s391 = scalar_lea.hbm %s1, %s390
          %s392 = sadd.s32 1, %s366
          %s393 = scalar_lea.vmem [#allocation2], %s392
          // Predicated region
          $region81: #{tpu_custom_call.1} parent=75 // pred_check
            _
          $region82: #{tpu_custom_call.1} parent=75 // pred_check_branch
            %395 = sbr.rel target = $region84
          $region83: #{tpu_custom_call.1} parent=75 // pred_region
            %396 = sst [smem:[#allocation12]] [#allocation31]
            %397 = sst [smem:[#allocation13]] [#allocation30]
          $region84: #{tpu_custom_call.1} parent=75 // pred_fallthru
            _
          %399 = shalt.err (0)
          %s401 = sshll.u32 %s391, 4
          %s402 = int_to_ptr.hbm [resolvable:$true] %s401
          %s403 = sshll.u32 %s393, 4
          %s404 = int_to_ptr.vmem [resolvable:$true] %s403
          %406 = dma.hbm_to_vmem [thread:$0]  %s402, 16, %s404, %s368
          %s407 = sadd.s32 %s196, 2
          %s408 = sshra.s32 %s407, 7
          %s409 = sand.u32 %s407, 127
          %s410 = sadd.s32 %s408, %s351
          %s411 = smul.u32 %s410, 128
          %s412 = sshra.s32 %s407, 7
          %s413 = sand.u32 %s407, 127
          %s414 = sadd.s32 %s411, %s413
          %s415 = sld [smem:[#allocation5 + %s414]]
          %s416 = scalar_lea.hbm %s1, %s415
          %s417 = sadd.s32 2, %s366
          %s418 = scalar_lea.vmem [#allocation2], %s417
          // Predicated region
          $region85: #{tpu_custom_call.1} parent=75 // pred_check
            _
          $region86: #{tpu_custom_call.1} parent=75 // pred_check_branch
            %420 = sbr.rel target = $region88
          $region87: #{tpu_custom_call.1} parent=75 // pred_region
            %421 = sst [smem:[#allocation12]] [#allocation33]
            %422 = sst [smem:[#allocation13]] [#allocation32]
          $region88: #{tpu_custom_call.1} parent=75 // pred_fallthru
            _
          %424 = shalt.err (0)
          %s426 = sshll.u32 %s416, 4
          %s427 = int_to_ptr.hbm [resolvable:$true] %s426
          %s428 = sshll.u32 %s418, 4
          %s429 = int_to_ptr.vmem [resolvable:$true] %s428
          %431 = dma.hbm_to_vmem [thread:$0]  %s427, 16, %s429, %s368
          %s432 = sadd.s32 %s196, 3
          %s433 = sshra.s32 %s432, 7
          %s434 = sand.u32 %s432, 127
          %s435 = sadd.s32 %s433, %s351
          %s436 = smul.u32 %s435, 128
          %s437 = sshra.s32 %s432, 7
          %s438 = sand.u32 %s432, 127
          %s439 = sadd.s32 %s436, %s438
          %s440 = sld [smem:[#allocation5 + %s439]]
          %s441 = scalar_lea.hbm %s1, %s440
          %s442 = sadd.s32 3, %s366
          %s443 = scalar_lea.vmem [#allocation2], %s442
          // Predicated region
          $region89: #{tpu_custom_call.1} parent=75 // pred_check
            _
          $region90: #{tpu_custom_call.1} parent=75 // pred_check_branch
            %445 = sbr.rel target = $region92
          $region91: #{tpu_custom_call.1} parent=75 // pred_region
            %446 = sst [smem:[#allocation12]] [#allocation35]
            %447 = sst [smem:[#allocation13]] [#allocation34]
          $region92: #{tpu_custom_call.1} parent=75 // pred_fallthru
            _
          %449 = shalt.err (0)
          %s451 = sshll.u32 %s441, 4
          %s452 = int_to_ptr.hbm [resolvable:$true] %s451
          %s453 = sshll.u32 %s443, 4
          %s454 = int_to_ptr.vmem [resolvable:$true] %s453
          %456 = dma.hbm_to_vmem [thread:$0]  %s452, 16, %s454, %s368
          %s457 = sadd.s32 %s196, 4
          %s458 = sshra.s32 %s457, 7
          %s459 = sand.u32 %s457, 127
          %s460 = sadd.s32 %s458, %s351
          %s461 = smul.u32 %s460, 128
          %s462 = sshra.s32 %s457, 7
          %s463 = sand.u32 %s457, 127
          %s464 = sadd.s32 %s461, %s463
          %s465 = sld [smem:[#allocation5 + %s464]]
          %s466 = scalar_lea.hbm %s1, %s465
          %s467 = sadd.s32 4, %s366
          %s468 = scalar_lea.vmem [#allocation2], %s467
          // Predicated region
          $region93: #{tpu_custom_call.1} parent=75 // pred_check
            _
          $region94: #{tpu_custom_call.1} parent=75 // pred_check_branch
            %470 = sbr.rel target = $region96
          $region95: #{tpu_custom_call.1} parent=75 // pred_region
            %471 = sst [smem:[#allocation12]] [#allocation37]
            %472 = sst [smem:[#allocation13]] [#allocation36]
          $region96: #{tpu_custom_call.1} parent=75 // pred_fallthru
            _
          %474 = shalt.err (0)
          %s476 = sshll.u32 %s466, 4
          %s477 = int_to_ptr.hbm [resolvable:$true] %s476
          %s478 = sshll.u32 %s468, 4
          %s479 = int_to_ptr.vmem [resolvable:$true] %s478
          %481 = dma.hbm_to_vmem [thread:$0]  %s477, 16, %s479, %s368
          %s482 = sadd.s32 %s196, 5
          %s483 = sshra.s32 %s482, 7
          %s484 = sand.u32 %s482, 127
          %s485 = sadd.s32 %s483, %s351
          %s486 = smul.u32 %s485, 128
          %s487 = sshra.s32 %s482, 7
          %s488 = sand.u32 %s482, 127
          %s489 = sadd.s32 %s486, %s488
          %s490 = sld [smem:[#allocation5 + %s489]]
          %s491 = scalar_lea.hbm %s1, %s490
          %s492 = sadd.s32 5, %s366
          %s493 = scalar_lea.vmem [#allocation2], %s492
          // Predicated region
          $region97: #{tpu_custom_call.1} parent=75 // pred_check
            _
          $region98: #{tpu_custom_call.1} parent=75 // pred_check_branch
            %495 = sbr.rel target = $region100
          $region99: #{tpu_custom_call.1} parent=75 // pred_region
            %496 = sst [smem:[#allocation12]] [#allocation39]
            %497 = sst [smem:[#allocation13]] [#allocation38]
          $region100: #{tpu_custom_call.1} parent=75 // pred_fallthru
            _
          %499 = shalt.err (0)
          %s501 = sshll.u32 %s491, 4
          %s502 = int_to_ptr.hbm [resolvable:$true] %s501
          %s503 = sshll.u32 %s493, 4
          %s504 = int_to_ptr.vmem [resolvable:$true] %s503
          %506 = dma.hbm_to_vmem [thread:$0]  %s502, 16, %s504, %s368
          %s507 = sadd.s32 %s196, 6
          %s508 = sshra.s32 %s507, 7
          %s509 = sand.u32 %s507, 127
          %s510 = sadd.s32 %s508, %s351
          %s511 = smul.u32 %s510, 128
          %s512 = sshra.s32 %s507, 7
          %s513 = sand.u32 %s507, 127
          %s514 = sadd.s32 %s511, %s513
          %s515 = sld [smem:[#allocation5 + %s514]]
          %s516 = scalar_lea.hbm %s1, %s515
          %s517 = sadd.s32 6, %s366
          %s518 = scalar_lea.vmem [#allocation2], %s517
          // Predicated region
          $region101: #{tpu_custom_call.1} parent=75 // pred_check
            _
          $region102: #{tpu_custom_call.1} parent=75 // pred_check_branch
            %520 = sbr.rel target = $region104
          $region103: #{tpu_custom_call.1} parent=75 // pred_region
            %521 = sst [smem:[#allocation12]] [#allocation41]
            %522 = sst [smem:[#allocation13]] [#allocation40]
          $region104: #{tpu_custom_call.1} parent=75 // pred_fallthru
            _
          %524 = shalt.err (0)
          %s526 = sshll.u32 %s516, 4
          %s527 = int_to_ptr.hbm [resolvable:$true] %s526
          %s528 = sshll.u32 %s518, 4
          %s529 = int_to_ptr.vmem [resolvable:$true] %s528
          %531 = dma.hbm_to_vmem [thread:$0]  %s527, 16, %s529, %s368
          %s532 = sadd.s32 %s196, 7
          %s533 = sshra.s32 %s532, 7
          %s534 = sand.u32 %s532, 127
          %s535 = sadd.s32 %s533, %s351
          %s536 = smul.u32 %s535, 128
          %s537 = sshra.s32 %s532, 7
          %s538 = sand.u32 %s532, 127
          %s539 = sadd.s32 %s536, %s538
          %s540 = sld [smem:[#allocation5 + %s539]]
          %s541 = scalar_lea.hbm %s1, %s540
          %s542 = sadd.s32 7, %s366
          %s543 = scalar_lea.vmem [#allocation2], %s542
          // Predicated region
          $region105: #{tpu_custom_call.1} parent=75 // pred_check
            _
          $region106: #{tpu_custom_call.1} parent=75 // pred_check_branch
            %545 = sbr.rel target = $region108
          $region107: #{tpu_custom_call.1} parent=75 // pred_region
            %546 = sst [smem:[#allocation12]] [#allocation43]
            %547 = sst [smem:[#allocation13]] [#allocation42]
          $region108: #{tpu_custom_call.1} parent=75 // pred_fallthru
            _
          %549 = shalt.err (0)
          %s551 = sshll.u32 %s541, 4
          %s552 = int_to_ptr.hbm [resolvable:$true] %s551
          %s553 = sshll.u32 %s543, 4
          %s554 = int_to_ptr.vmem [resolvable:$true] %s553
          %556 = dma.hbm_to_vmem [thread:$0]  %s552, 16, %s554, %s368
        $region76: #{tpu_custom_call.1} parent=31 // pred_fallthru
          _
        %v557 = vld [vmem:[%s346] sm:$0xff]
        %v558 = vld [vmem:[#allocation6] sm:$0xff]
        %v559 = vadd.f32 %v557, %v558
        %v560 = vlaneseq
        %v561 = vand.u32 %v560, 127
        %vm562 = vcmp.lt.s32.totalorder %v561, 32
        %v563 = vsel %vm562, %v559, 0.0
        %564 = vadd.xlane.f32.xlu0 %v563
        %v565 = vpop.xlane.xlu0 %564
        %v566 = vmul.f32 %v565, 0.03125
        %v567 = vsub.f32 %v559, %v566
        %v568 = vsel %vm562, %v567, 0.0
        %v569 = vmul.f32 %v568, %v568
        %570 = vadd.xlane.f32.xlu0 %v569
        %v571 = vpop.xlane.xlu0 %570
        %v572 = vmul.f32 %v571, 0.03125
        %v573 = vadd.f32 %v572, 1e-12
        %v574 = vrsqrt.pop %v573
        %v575 = vmul.f32 %v574, %v573
        %v576 = vmul.f32 %v575, %v574
        %v577 = vmul.f32 0.5, %v576
        %v578 = vsub.f32 1.5, %v577
        %v579 = vmul.f32 %v574, %v578
        %vm580 = vweird.f32 %v573
        %vm581 = vweird.f32 %v574
        %vm582 = vmor %vm580, %vm581
        %v583 = vsel %vm582, %v574, %v579
        %v584 = vmul.f32 %v568, %v583
        %v585 = vld [vmem:[%s3] sm:$0x1]
        %v587 = vperm.slane %v585, 0
        %v589 = vmul.f32 %v584, %v587
        %v590 = vld [vmem:[%s4] sm:$0x1]
        %v592 = vperm.slane %v590, 0
        %v594 = vadd.f32 %v589, %v592
        %595 = vst [vmem:[%s194] sm:$0xff] %v594
        %s596 = sand.u32 %s118, 1
        %s597 = scalar_lea.sflag [#allocation8], %s596
        %s598 = sand.u32 %s118, 1
        %s599 = smul.addr %s598, 8
        %s600 = scalar_lea.vmem [#allocation9], %s599
        // Predicated region
        $region109: #{tpu_custom_call.1} parent=31 // pred_check
          %p601 = pneg %p128
        $region110: #{tpu_custom_call.1} parent=31 // pred_check_branch
          %603 = sbr.rel (%p601) target = $region112
        $region111: #{tpu_custom_call.1} parent=31 // pred_region
          %605 = vsyncadd %s597, 0
          %s606 = sadd.s32 %s32, %s33
          %s607 = smul.addr %s606, 8
          %s608 = scalar_lea.hbm %s5, %s607
          %s610 = sshll.u32 %s600, 4
          %s611 = int_to_ptr.vmem [resolvable:$true] %s610
          %s612 = sshll.u32 %s608, 4
          %s613 = int_to_ptr.hbm [resolvable:$true] %s612
          %615 = dma.vmem_to_hbm [thread:$0]  %s611, 128, %s613, %s597
        $region112: #{tpu_custom_call.1} parent=31 // pred_fallthru
          _
      $region32: #{tpu_custom_call.1} parent=5 // pred_fallthru
        _
      %p616 = scmp.le.s32.totalorder 2, %s23
      // Predicated region
      $region113: #{tpu_custom_call.1} parent=5 // pred_check
        %p617 = pneg %p616
      $region114: #{tpu_custom_call.1} parent=5 // pred_check_branch
        %619 = sbr.rel (%p617) target = $region116
      $region115: #{tpu_custom_call.1} parent=5 // pred_region
        %s620 = ssub.s32 %s23, 2
        // Predicated region
        $region117: #{tpu_custom_call.1} parent=115 // pred_check
          %p621 = pneg %p134
        $region118: #{tpu_custom_call.1} parent=115 // pred_check_branch
          %623 = sbr.rel (%p621) target = $region120
        $region119: #{tpu_custom_call.1} parent=115 // pred_region
          %s624 = sand.u32 %s119, 1
          %s625 = scalar_lea.sflag [#allocation8], %s624
          %s626 = sand.u32 %s119, 1
          %s627 = smul.addr %s626, 8
          %s628 = scalar_lea.vmem [#allocation9], %s627
          %630 = dma.done %s625, 128
        $region120: #{tpu_custom_call.1} parent=115 // pred_fallthru
          _
      $region116: #{tpu_custom_call.1} parent=5 // pred_fallthru
        _
    $region6: #{tpu_custom_call.1} parent=1 // loop_footer
      %s27 = sadd.s32 1, %s23
    $region7: #{tpu_custom_call.1} parent=1 // loop_footer_branch
      %22 = sbr.rel target = $region3
    $region8: #{tpu_custom_call.1} parent=1 // loop_exit
      _
    %631 = vsyncpa [#allocation7], 1
    %s632 = scalar_lea.sflag [#allocation7], 1
    %633 = vsyncpa %s632, 1
    %634 = vsyncpa [#allocation8], 1
    %s635 = scalar_lea.sflag [#allocation8], 1
    %636 = vsyncpa %s635, 1
  %637 = vsyncmov [#allocation3]
  %s638 = vpop.sfrf %637
  %p639 = scmp.eq.s32.totalorder %s638, 0
  %p640 = pneg %p639
  %642 = shalt.err (%p640)
  %s643 = scalar_lea.sflag [#allocation3], 1
  %644 = vsyncmov %s643
  %s645 = vpop.sfrf %644
  %p646 = scmp.eq.s32.totalorder %s645, 0
  %p647 = pneg %p646
  %649 = shalt.err (%p647)

</llo_original>
